<compile_context>
chip_gen: v7x
topology: tpu7x:2x2x1
jax: 0.10.0
libtpu: 0.0.40
codegen_flags: <defaults>
</compile_context>

<pallas_src>
import jax
import jax.numpy as jnp
from jax.experimental import pallas as pl
from jax.experimental.pallas import tpu as pltpu


def _round_up(x, m):
    return (x + m - 1) // m * m


def dqn_kernel(x_ref, w1_ref, b1_ref, w2_ref, b2_ref, w3_ref, b3_ref, o_ref):
    # x arrives as f32 (4 B/elem from HBM, no separate wrapper cast pass);
    # cast to bf16 just before the MXU dot.  Accumulate / bias / ReLU stay f32
    # on the VPU (v5e has no bf16 VPU).
    x = x_ref[...].astype(jnp.bfloat16)
    h1 = jnp.dot(x, w1_ref[...], preferred_element_type=jnp.float32)
    h1 = jnp.maximum(h1 + b1_ref[...], 0.0)
    h2 = jnp.dot(h1.astype(jnp.bfloat16), w2_ref[...],
                 preferred_element_type=jnp.float32)
    h2 = jnp.maximum(h2 + b2_ref[...], 0.0)
    o = jnp.dot(h2.astype(jnp.bfloat16), w3_ref[...],
                preferred_element_type=jnp.float32)
    o_ref[...] = (o + b3_ref[...]).astype(o_ref.dtype)


def dqn_forward(x_nchw, params, *, tile_b_max=2048):
    """x_nchw: (B, 3, H, W) float32. Returns (B, 2) float32 Q-values."""
    w1, b1, w2, b2, w3, b3 = params
    B = x_nchw.shape[0]
    D = w1.shape[0]

    # flatten(start_dim=1): row-major over (C, H, W) matches torch.
    # x stays f32 -- the bf16 cast is done inside the kernel (no extra HBM pass).
    x_flat = x_nchw.reshape(B, -1)

    # Weights are tiny: pre-cast to bf16 for the MXU. Biases stay f32.
    w1b = w1.astype(jnp.bfloat16)
    w2b = w2.astype(jnp.bfloat16)
    w3b = w3.astype(jnp.bfloat16)

    # Batch tile: big (amortize ~0.35us/step, saturate HBM pipeline), 8-row
    # aligned (f32 sublanes), split so the grid has >=2 steps when possible
    # (v7x megacore), capped for VMEM (2 x tile_b x D x 4B double-buffered).
    tile_b = min(tile_b_max, max(8, _round_up(pl.cdiv(B, 2), 8)))
    if tile_b >= B:
        tile_b = B  # single exact block (block dims == full array dims)
    grid = (pl.cdiv(B, tile_b),)  # partial last tile handled by Pallas; no jnp.pad

    flops = 2 * B * (D * 24 + 24 * 32 + 32 * 2)
    bytes_accessed = (B * D * 4                          # f32 activations in
                      + (D * 24 + 24 * 32 + 32 * 2) * 2  # bf16 weights
                      + (24 + 32 + 2) * 4                # f32 biases
                      + B * 2 * 4)                       # f32 Q-values out

    const2 = lambda i: (0, 0)  # weights/biases: same block every step -> resident

    out = pl.pallas_call(
        dqn_kernel,
        out_shape=jax.ShapeDtypeStruct((B, 2), jnp.float32),
        grid=grid,
        in_specs=[
            pl.BlockSpec((tile_b, D), lambda i: (i, 0)),   # x tile (pipelined)
            pl.BlockSpec(w1b.shape, const2),
            pl.BlockSpec(b1.shape, const2),
            pl.BlockSpec(w2b.shape, const2),
            pl.BlockSpec(b2.shape, const2),
            pl.BlockSpec(w3b.shape, const2),
            pl.BlockSpec(b3.shape, const2),
        ],
        out_specs=pl.BlockSpec((tile_b, 2), lambda i: (i, 0)),
        compiler_params=pltpu.CompilerParams(
            dimension_semantics=("parallel",),
            vmem_limit_bytes=48 * 1024 * 1024),
        cost_estimate=pl.CostEstimate(
            flops=flops, transcendentals=0, bytes_accessed=bytes_accessed),
    )(x_flat, w1b, b1, w2b, b2, w3b, b3)

    return out


def init_params(img_height, img_width, key):
    """Deterministic init mimicking nn.Linear default (uniform +-1/sqrt(fan_in)).

    Weights stored as (in_features, out_features); biases as (1, out_features).
    """
    d_in = img_height * img_width * 3
    dims = [(d_in, 24), (24, 32), (32, 2)]
    params = []
    for i, (fi, fo) in enumerate(dims):
        kw, kb = jax.random.split(jax.random.fold_in(key, i))
        bound = 1.0 / (fi ** 0.5)
        w = jax.random.uniform(kw, (fi, fo), jnp.float32, -bound, bound)
        b = jax.random.uniform(kb, (1, fo), jnp.float32, -bound, bound)
        params += [w, b]
    return tuple(params)


def dqn_reference(x_nchw, params):
    """Pure-JAX f32 reference for correctness check."""
    w1, b1, w2, b2, w3, b3 = params
    x = x_nchw.reshape(x_nchw.shape[0], -1)
    h1 = jnp.maximum(x @ w1 + b1, 0.0)
    h2 = jnp.maximum(h1 @ w2 + b2, 0.0)
    return h2 @ w3 + b3


if __name__ == "__main__":
    B, C, H, W = 2, 3, 16, 16  # DQN hardcodes 3 input channels
    key = jax.random.PRNGKey(0)
    kx, kp = jax.random.split(key)

    x = jax.random.normal(kx, (B, C, H, W), dtype=jnp.float32)
    params = init_params(H, W, kp)

    fwd = jax.jit(dqn_forward, static_argnames=("tile_b_max",))

    # Small-batch path (single exact tile).
    out = jax.block_until_ready(fwd(x, params))
    ref = dqn_reference(x, params)
    assert out.shape == (B, 2), out.shape
    # bf16 MXU operands -> looser tolerance vs the pure-f32 reference.
    assert jnp.allclose(out, ref, atol=5e-2, rtol=5e-2), "mismatch vs reference"

    # Multi-tile path: exercises the batch grid, a partial last tile (20 rows
    # over two 16-row tiles, no jnp.pad), and resident weights.
    B2 = 20
    x2 = jax.random.normal(jax.random.fold_in(key, 7), (B2, C, H, W), jnp.float32)
    out2 = jax.block_until_ready(fwd(x2, params, tile_b_max=16))  # grid=(2,)
    ref2 = dqn_reference(x2, params)
    assert out2.shape == (B2, 2), out2.shape
    assert jnp.allclose(out2, ref2, atol=5e-2, rtol=5e-2), "mismatch (multi-tile)"

    print("KERNEL_OK")
</pallas_src>

<mosaic_0001>
module attributes {stable_mosaic.version = 11 : i64} {
  func.func @dqn_kernel(%arg0: i32, %arg1: memref<2x768xf32, #tpu.memory_space<vmem>>, %arg2: memref<768x24xbf16, #tpu.memory_space<vmem>>, %arg3: memref<1x24xf32, #tpu.memory_space<vmem>>, %arg4: memref<24x32xbf16, #tpu.memory_space<vmem>>, %arg5: memref<1x32xf32, #tpu.memory_space<vmem>>, %arg6: memref<32x2xbf16, #tpu.memory_space<vmem>>, %arg7: memref<1x2xf32, #tpu.memory_space<vmem>>, %arg8: memref<2x2xf32, #tpu.memory_space<vmem>>) attributes {dimension_semantics = [#tpu.dimension_semantics<parallel>], iteration_bounds = array<i64: 1>, scalar_prefetch = 0 : i64, scratch_operands = 0 : i64, tpu.core_type = #tpu.core_type<tc>, window_params = [{transform_indices = @transform_0, window_bounds = array<i64: 2, 768>}, {pipeline_mode = #tpu.pipeline_mode<synchronous>, transform_indices = @transform_1, window_bounds = array<i64: 768, 24>}, {pipeline_mode = #tpu.pipeline_mode<synchronous>, transform_indices = @transform_2, window_bounds = array<i64: 1, 24>}, {pipeline_mode = #tpu.pipeline_mode<synchronous>, transform_indices = @transform_3, window_bounds = array<i64: 24, 32>}, {pipeline_mode = #tpu.pipeline_mode<synchronous>, transform_indices = @transform_4, window_bounds = array<i64: 1, 32>}, {pipeline_mode = #tpu.pipeline_mode<synchronous>, transform_indices = @transform_5, window_bounds = array<i64: 32, 2>}, {pipeline_mode = #tpu.pipeline_mode<synchronous>, transform_indices = @transform_6, window_bounds = array<i64: 1, 2>}, {transform_indices = @transform_7, window_bounds = array<i64: 2, 2>}]} {
    %c0 = arith.constant 0 : index
    %c0_0 = arith.constant 0 : index
    %0 = vector.load %arg1[%c0, %c0_0] : memref<2x768xf32, #tpu.memory_space<vmem>>, vector<2x768xf32>
    %1 = arith.truncf %0 : vector<2x768xf32> to vector<2x768xbf16>
    %c0_1 = arith.constant 0 : index
    %c0_2 = arith.constant 0 : index
    %2 = vector.load %arg2[%c0_1, %c0_2] : memref<768x24xbf16, #tpu.memory_space<vmem>>, vector<768x24xbf16>
    %cst = arith.constant dense<0.000000e+00> : vector<2x24xf32>
    %3 = tpu.matmul %1, %2, %cst {dimension_numbers = #tpu.dot_dimension_numbers<[1], [0], [0], [1], [0, 0, 1, 1], [], []>} : vector<2x768xbf16>, vector<768x24xbf16>, vector<2x24xf32> -> vector<2x24xf32>
    %c0_3 = arith.constant 0 : index
    %c0_4 = arith.constant 0 : index
    %4 = vector.load %arg3[%c0_3, %c0_4] : memref<1x24xf32, #tpu.memory_space<vmem>>, vector<1x24xf32>
    %5 = vector.broadcast %4 : vector<1x24xf32> to vector<2x24xf32>
    %6 = arith.addf %3, %5 : vector<2x24xf32>
    %cst_5 = arith.constant 0.000000e+00 : f32
    %7 = vector.broadcast %cst_5 : f32 to vector<2x24xf32>
    %8 = arith.maximumf %6, %7 : vector<2x24xf32>
    %9 = arith.truncf %8 : vector<2x24xf32> to vector<2x24xbf16>
    %c0_6 = arith.constant 0 : index
    %c0_7 = arith.constant 0 : index
    %10 = vector.load %arg4[%c0_6, %c0_7] : memref<24x32xbf16, #tpu.memory_space<vmem>>, vector<24x32xbf16>
    %cst_8 = arith.constant dense<0.000000e+00> : vector<2x32xf32>
    %11 = tpu.matmul %9, %10, %cst_8 {dimension_numbers = #tpu.dot_dimension_numbers<[1], [0], [0], [1], [0, 0, 1, 1], [], []>} : vector<2x24xbf16>, vector<24x32xbf16>, vector<2x32xf32> -> vector<2x32xf32>
    %c0_9 = arith.constant 0 : index
    %c0_10 = arith.constant 0 : index
    %12 = vector.load %arg5[%c0_9, %c0_10] : memref<1x32xf32, #tpu.memory_space<vmem>>, vector<1x32xf32>
    %13 = vector.broadcast %12 : vector<1x32xf32> to vector<2x32xf32>
    %14 = arith.addf %11, %13 : vector<2x32xf32>
    %cst_11 = arith.constant 0.000000e+00 : f32
    %15 = vector.broadcast %cst_11 : f32 to vector<2x32xf32>
    %16 = arith.maximumf %14, %15 : vector<2x32xf32>
    %17 = arith.truncf %16 : vector<2x32xf32> to vector<2x32xbf16>
    %c0_12 = arith.constant 0 : index
    %c0_13 = arith.constant 0 : index
    %18 = vector.load %arg6[%c0_12, %c0_13] : memref<32x2xbf16, #tpu.memory_space<vmem>>, vector<32x2xbf16>
    %cst_14 = arith.constant dense<0.000000e+00> : vector<2x2xf32>
    %19 = tpu.matmul %17, %18, %cst_14 {dimension_numbers = #tpu.dot_dimension_numbers<[1], [0], [0], [1], [0, 0, 1, 1], [], []>} : vector<2x32xbf16>, vector<32x2xbf16>, vector<2x2xf32> -> vector<2x2xf32>
    %c0_15 = arith.constant 0 : index
    %c0_16 = arith.constant 0 : index
    %20 = vector.load %arg7[%c0_15, %c0_16] : memref<1x2xf32, #tpu.memory_space<vmem>>, vector<1x2xf32>
    %21 = vector.broadcast %20 : vector<1x2xf32> to vector<2x2xf32>
    %22 = arith.addf %19, %21 : vector<2x2xf32>
    %c0_17 = arith.constant 0 : index
    %c0_18 = arith.constant 0 : index
    %23 = vector.load %arg8[%c0_17, %c0_18] : memref<2x2xf32, #tpu.memory_space<vmem>>, vector<2x2xf32>
    tpu.vector_store %arg8[%c0_17, %c0_18], %22 {strides = array<i32>} : memref<2x2xf32, #tpu.memory_space<vmem>>, vector<2x2xf32>,
    return
  }
  func.func @transform_0(%arg0: i32) -> (i32, i32) {
    %c0_i32 = arith.constant 0 : i32
    %c0_i32_0 = arith.constant 0 : i32
    return %arg0, %c0_i32 : i32, i32
  }
  func.func @transform_1(%arg0: i32) -> (i32, i32) {
    %c0_i32 = arith.constant 0 : i32
    %c0_i32_0 = arith.constant 0 : i32
    %c0_i32_1 = arith.constant 0 : i32
    return %c0_i32, %c0_i32_0 : i32, i32
  }
  func.func @transform_2(%arg0: i32) -> (i32, i32) {
    %c0_i32 = arith.constant 0 : i32
    %c0_i32_0 = arith.constant 0 : i32
    %c0_i32_1 = arith.constant 0 : i32
    return %c0_i32, %c0_i32_0 : i32, i32
  }
  func.func @transform_3(%arg0: i32) -> (i32, i32) {
    %c0_i32 = arith.constant 0 : i32
    %c0_i32_0 = arith.constant 0 : i32
    %c0_i32_1 = arith.constant 0 : i32
    return %c0_i32, %c0_i32_0 : i32, i32
  }
  func.func @transform_4(%arg0: i32) -> (i32, i32) {
    %c0_i32 = arith.constant 0 : i32
    %c0_i32_0 = arith.constant 0 : i32
    %c0_i32_1 = arith.constant 0 : i32
    return %c0_i32, %c0_i32_0 : i32, i32
  }
  func.func @transform_5(%arg0: i32) -> (i32, i32) {
    %c0_i32 = arith.constant 0 : i32
    %c0_i32_0 = arith.constant 0 : i32
    %c0_i32_1 = arith.constant 0 : i32
    return %c0_i32, %c0_i32_0 : i32, i32
  }
  func.func @transform_6(%arg0: i32) -> (i32, i32) {
    %c0_i32 = arith.constant 0 : i32
    %c0_i32_0 = arith.constant 0 : i32
    %c0_i32_1 = arith.constant 0 : i32
    return %c0_i32, %c0_i32_0 : i32, i32
  }
  func.func @transform_7(%arg0: i32) -> (i32, i32) {
    %c0_i32 = arith.constant 0 : i32
    %c0_i32_0 = arith.constant 0 : i32
    return %arg0, %c0_i32 : i32, i32
  }
}

</mosaic_0001>

<llo_original>
// kernel: dqn_forward.1
$region0: #{dqn_forward.1}
  #allocation0 [shape = 'u32[]', space=smem, size = 0x4, offset = 0x4, fixed_abs, tag = 'smem constant byte address 0x4 - core index']
  #allocation1 [shape = 'u32[144,128]{1,0:T(1,128)}', space=vmem, size = 0x12000, scoped, tag = 'internal scratch']
  %s0 = inlined_call_operand.vmem [shape: f32[2,768], index: 0, kind: input, shape index: {}]
  %s1 = inlined_call_operand.vmem [shape: bf16[768,24], index: 1, kind: input, shape index: {}]
  %s2 = inlined_call_operand.vmem [shape: f32[1,24], index: 2, kind: input, shape index: {}]
  %s3 = inlined_call_operand.vmem [shape: bf16[24,32], index: 3, kind: input, shape index: {}]
  %s4 = inlined_call_operand.vmem [shape: f32[1,32], index: 4, kind: input, shape index: {}]
  %s5 = inlined_call_operand.vmem [shape: bf16[32,2], index: 5, kind: input, shape index: {}]
  %s6 = inlined_call_operand.vmem [shape: f32[1,2], index: 6, kind: input, shape index: {}]
  %s7 = inlined_call_operand.hbm [shape: f32[2,2], index: 7, kind: output, shape index: {}]
  %s8 = sld [smem:[#allocation0]]
  $region38: #{dqn_forward.1} parent=0
    _
  %s10 = ssub.s32 1, %s8
  %s11 = scalar_select 0, %s10, %s8
  $region1: #{dqn_forward.1} parent=0
    #allocation2 [shape = 'u8[1024]{0}', space=vmem, size = 0x400, scoped, tag = 'output window, operand 0, single buffered']
    #allocation3 [shape = 's32[1]{0}', space=sflag, size = 0x4, scoped, tag = 'scoped memory for dqn_forward.1']
    %12 = vsyncpa [#allocation3], 0
    // Predicated region
    $region2: #{dqn_forward.1} parent=1 // pred_check
      _
    $region3: #{dqn_forward.1} parent=1 // pred_check_branch
      %14 = sbr.rel (0) target = $region5
    $region4: #{dqn_forward.1} parent=1 // pred_region
      _
    $region5: #{dqn_forward.1} parent=1 // pred_fallthru
      _
    // Predicated region
    $region6: #{dqn_forward.1} parent=1 // pred_check
      _
    $region7: #{dqn_forward.1} parent=1 // pred_check_branch
      %16 = sbr.rel (0) target = $region9
    $region8: #{dqn_forward.1} parent=1 // pred_region
      _
    $region9: #{dqn_forward.1} parent=1 // pred_fallthru
      _
    // Predicated region
    $region10: #{dqn_forward.1} parent=1 // pred_check
      _
    $region11: #{dqn_forward.1} parent=1 // pred_check_branch
      %18 = sbr.rel (0) target = $region13
    $region12: #{dqn_forward.1} parent=1 // pred_region
      _
    $region13: #{dqn_forward.1} parent=1 // pred_fallthru
      _
    // Predicated region
    $region14: #{dqn_forward.1} parent=1 // pred_check
      _
    $region15: #{dqn_forward.1} parent=1 // pred_check_branch
      %20 = sbr.rel (0) target = $region17
    $region16: #{dqn_forward.1} parent=1 // pred_region
      _
    $region17: #{dqn_forward.1} parent=1 // pred_fallthru
      _
    // Predicated region
    $region18: #{dqn_forward.1} parent=1 // pred_check
      _
    $region19: #{dqn_forward.1} parent=1 // pred_check_branch
      %22 = sbr.rel (0) target = $region21
    $region20: #{dqn_forward.1} parent=1 // pred_region
      _
    $region21: #{dqn_forward.1} parent=1 // pred_fallthru
      _
    // Predicated region
    $region22: #{dqn_forward.1} parent=1 // pred_check
      _
    $region23: #{dqn_forward.1} parent=1 // pred_check_branch
      %24 = sbr.rel (0) target = $region25
    $region24: #{dqn_forward.1} parent=1 // pred_region
      _
    $region25: #{dqn_forward.1} parent=1 // pred_fallthru
      _
    // Predicated region
    $region26: #{dqn_forward.1} parent=1 // pred_check
      _
    $region27: #{dqn_forward.1} parent=1 // pred_check_branch
      %26 = sbr.rel (0) target = $region29
    $region28: #{dqn_forward.1} parent=1 // pred_region
      _
    $region29: #{dqn_forward.1} parent=1 // pred_fallthru
      _
    %v28 = vld [vmem:[%s0] sm:$0xff]
    %v29 = vld [vmem:[%s0 + $0x8] sm:$0xf]
    %v32 = vcombine.high %v28, %v28
    %v34 = vunpack.c.l.s4 1983009808
    %v35 = vunpack.c.0.s8 %v34
    %v36 = vlaneseq
    %v37 = vshrl.u32 %v36, 7
    %v38 = vsub.s32 %v35, %v37
    %v39 = vrot.slane %v28, %v38
    %v41 = vunpack.c.l.s4 1983009808
    %v42 = vunpack.c.0.s8 %v41
    %v43 = vlaneseq
    %v44 = vshrl.u32 %v43, 7
    %v45 = vsub.s32 %v42, %v44
    %v46 = vrot.slane %v32, %v45
    %v47 = vcombine.high %v39, %v39
    %v48 = vcombine.high %v46, %v46
    %v50 = vunpack.c.l.s4 1983009808
    %v51 = vunpack.c.0.s8 %v50
    %v52 = vlaneseq
    %v53 = vshrl.u32 %v52, 7
    %v54 = vsub.s32 %v51, %v53
    %v55 = vrot.slane %v29, %v54
    %v56 = vcombine.high %v55, %v55
    %v63 = vpack.c.bf16 %v39, %v39
    %v64 = vpack.c.bf16 %v47, %v47
    %v65 = vpack.c.bf16 %v46, %v46
    %v66 = vpack.c.bf16 %v48, %v48
    %v67 = vpack.c.bf16 %v55, %v55
    %v68 = vpack.c.bf16 %v56, %v56
    %v69 = vld [vmem:[%s1] sm:$0xf]
    %v70 = vld [vmem:[%s1 + $0x4] sm:$0xf]
    %v71 = vld [vmem:[%s1 + $0x8] sm:$0xf]
    %v72 = vld [vmem:[%s1 + $0xc] sm:$0xf]
    %v73 = vld [vmem:[%s1 + $0x10] sm:$0xf]
    %v74 = vld [vmem:[%s1 + $0x14] sm:$0xf]
    %v75 = vld [vmem:[%s1 + $0x18] sm:$0xf]
    %v76 = vld [vmem:[%s1 + $0x1c] sm:$0xf]
    %v77 = vld [vmem:[%s1 + $0x20] sm:$0xf]
    %v78 = vld [vmem:[%s1 + $0x24] sm:$0xf]
    %v79 = vld [vmem:[%s1 + $0x28] sm:$0xf]
    %v80 = vld [vmem:[%s1 + $0x2c] sm:$0xf]
    %v81 = vld [vmem:[%s1 + $0x30] sm:$0xf]
    %v82 = vld [vmem:[%s1 + $0x34] sm:$0xf]
    %v83 = vld [vmem:[%s1 + $0x38] sm:$0xf]
    %v84 = vld [vmem:[%s1 + $0x3c] sm:$0xf]
    %v85 = vld [vmem:[%s1 + $0x40] sm:$0xf]
    %v86 = vld [vmem:[%s1 + $0x44] sm:$0xf]
    %v87 = vld [vmem:[%s1 + $0x48] sm:$0xf]
    %v88 = vld [vmem:[%s1 + $0x4c] sm:$0xf]
    %v89 = vld [vmem:[%s1 + $0x50] sm:$0xf]
    %v90 = vld [vmem:[%s1 + $0x54] sm:$0xf]
    %v91 = vld [vmem:[%s1 + $0x58] sm:$0xf]
    %v92 = vld [vmem:[%s1 + $0x5c] sm:$0xf]
    %v93 = vld [vmem:[%s1 + $0x60] sm:$0xf]
    %v94 = vld [vmem:[%s1 + $0x64] sm:$0xf]
    %v95 = vld [vmem:[%s1 + $0x68] sm:$0xf]
    %v96 = vld [vmem:[%s1 + $0x6c] sm:$0xf]
    %v97 = vld [vmem:[%s1 + $0x70] sm:$0xf]
    %v98 = vld [vmem:[%s1 + $0x74] sm:$0xf]
    %v99 = vld [vmem:[%s1 + $0x78] sm:$0xf]
    %v100 = vld [vmem:[%s1 + $0x7c] sm:$0xf]
    %v101 = vld [vmem:[%s1 + $0x80] sm:$0xf]
    %v102 = vld [vmem:[%s1 + $0x84] sm:$0xf]
    %v103 = vld [vmem:[%s1 + $0x88] sm:$0xf]
    %v104 = vld [vmem:[%s1 + $0x8c] sm:$0xf]
    %v105 = vld [vmem:[%s1 + $0x90] sm:$0xf]
    %v106 = vld [vmem:[%s1 + $0x94] sm:$0xf]
    %v107 = vld [vmem:[%s1 + $0x98] sm:$0xf]
    %v108 = vld [vmem:[%s1 + $0x9c] sm:$0xf]
    %v109 = vld [vmem:[%s1 + $0xa0] sm:$0xf]
    %v110 = vld [vmem:[%s1 + $0xa4] sm:$0xf]
    %v111 = vld [vmem:[%s1 + $0xa8] sm:$0xf]
    %v112 = vld [vmem:[%s1 + $0xac] sm:$0xf]
    %v113 = vld [vmem:[%s1 + $0xb0] sm:$0xf]
    %v114 = vld [vmem:[%s1 + $0xb4] sm:$0xf]
    %v115 = vld [vmem:[%s1 + $0xb8] sm:$0xf]
    %v116 = vld [vmem:[%s1 + $0xbc] sm:$0xf]
    %v117 = vld [vmem:[%s1 + $0xc0] sm:$0xf]
    %v118 = vld [vmem:[%s1 + $0xc4] sm:$0xf]
    %v119 = vld [vmem:[%s1 + $0xc8] sm:$0xf]
    %v120 = vld [vmem:[%s1 + $0xcc] sm:$0xf]
    %v121 = vld [vmem:[%s1 + $0xd0] sm:$0xf]
    %v122 = vld [vmem:[%s1 + $0xd4] sm:$0xf]
    %v123 = vld [vmem:[%s1 + $0xd8] sm:$0xf]
    %v124 = vld [vmem:[%s1 + $0xdc] sm:$0xf]
    %v125 = vld [vmem:[%s1 + $0xe0] sm:$0xf]
    %v126 = vld [vmem:[%s1 + $0xe4] sm:$0xf]
    %v127 = vld [vmem:[%s1 + $0xe8] sm:$0xf]
    %v128 = vld [vmem:[%s1 + $0xec] sm:$0xf]
    %v129 = vld [vmem:[%s1 + $0xf0] sm:$0xf]
    %v130 = vld [vmem:[%s1 + $0xf4] sm:$0xf]
    %v131 = vld [vmem:[%s1 + $0xf8] sm:$0xf]
    %v132 = vld [vmem:[%s1 + $0xfc] sm:$0xf]
    %v133 = vld [vmem:[%s1 + $0x100] sm:$0xf]
    %v134 = vld [vmem:[%s1 + $0x104] sm:$0xf]
    %v135 = vld [vmem:[%s1 + $0x108] sm:$0xf]
    %v136 = vld [vmem:[%s1 + $0x10c] sm:$0xf]
    %v137 = vld [vmem:[%s1 + $0x110] sm:$0xf]
    %v138 = vld [vmem:[%s1 + $0x114] sm:$0xf]
    %v139 = vld [vmem:[%s1 + $0x118] sm:$0xf]
    %v140 = vld [vmem:[%s1 + $0x11c] sm:$0xf]
    %v141 = vld [vmem:[%s1 + $0x120] sm:$0xf]
    %v142 = vld [vmem:[%s1 + $0x124] sm:$0xf]
    %v143 = vld [vmem:[%s1 + $0x128] sm:$0xf]
    %v144 = vld [vmem:[%s1 + $0x12c] sm:$0xf]
    %v145 = vld [vmem:[%s1 + $0x130] sm:$0xf]
    %v146 = vld [vmem:[%s1 + $0x134] sm:$0xf]
    %v147 = vld [vmem:[%s1 + $0x138] sm:$0xf]
    %v148 = vld [vmem:[%s1 + $0x13c] sm:$0xf]
    %v149 = vld [vmem:[%s1 + $0x140] sm:$0xf]
    %v150 = vld [vmem:[%s1 + $0x144] sm:$0xf]
    %v151 = vld [vmem:[%s1 + $0x148] sm:$0xf]
    %v152 = vld [vmem:[%s1 + $0x14c] sm:$0xf]
    %v153 = vld [vmem:[%s1 + $0x150] sm:$0xf]
    %v154 = vld [vmem:[%s1 + $0x154] sm:$0xf]
    %v155 = vld [vmem:[%s1 + $0x158] sm:$0xf]
    %v156 = vld [vmem:[%s1 + $0x15c] sm:$0xf]
    %v157 = vld [vmem:[%s1 + $0x160] sm:$0xf]
    %v158 = vld [vmem:[%s1 + $0x164] sm:$0xf]
    %v159 = vld [vmem:[%s1 + $0x168] sm:$0xf]
    %v160 = vld [vmem:[%s1 + $0x16c] sm:$0xf]
    %v161 = vld [vmem:[%s1 + $0x170] sm:$0xf]
    %v162 = vld [vmem:[%s1 + $0x174] sm:$0xf]
    %v163 = vld [vmem:[%s1 + $0x178] sm:$0xf]
    %v164 = vld [vmem:[%s1 + $0x17c] sm:$0xf]
    %v165 = vld [vmem:[%s2] sm:$0x1]
    %v167 = vlaneseq
    %v168 = vshrl.u32 %v167, 7
    %v169 = vsub.s32 0, %v168
    %v170 = vrot.slane %v165, %v169
    %v268 = vunpack.c.l.b16 %v69
    %v269 = vunpack.c.l.b16 %v70
    %v270 = vunpack.c.l.b16 %v71
    %v271 = vunpack.c.l.b16 %v72
    %v272 = vunpack.c.l.b16 %v73
    %v273 = vunpack.c.l.b16 %v74
    %v274 = vunpack.c.l.b16 %v75
    %v275 = vunpack.c.l.b16 %v76
    %v276 = vunpack.c.l.b16 %v77
    %v277 = vunpack.c.l.b16 %v78
    %v278 = vunpack.c.l.b16 %v79
    %v279 = vunpack.c.l.b16 %v80
    %v280 = vunpack.c.l.b16 %v81
    %v281 = vunpack.c.l.b16 %v82
    %v282 = vunpack.c.l.b16 %v83
    %v283 = vunpack.c.l.b16 %v84
    %v284 = vunpack.c.l.b16 %v85
    %v285 = vunpack.c.l.b16 %v86
    %v286 = vunpack.c.l.b16 %v87
    %v287 = vunpack.c.l.b16 %v88
    %v288 = vunpack.c.l.b16 %v89
    %v289 = vunpack.c.l.b16 %v90
    %v290 = vunpack.c.l.b16 %v91
    %v291 = vunpack.c.l.b16 %v92
    %v292 = vunpack.c.l.b16 %v93
    %v293 = vunpack.c.l.b16 %v94
    %v294 = vunpack.c.l.b16 %v95
    %v295 = vunpack.c.l.b16 %v96
    %v296 = vunpack.c.l.b16 %v97
    %v297 = vunpack.c.l.b16 %v98
    %v298 = vunpack.c.l.b16 %v99
    %v299 = vunpack.c.l.b16 %v100
    %v300 = vunpack.c.l.b16 %v101
    %v301 = vunpack.c.l.b16 %v102
    %v302 = vunpack.c.l.b16 %v103
    %v303 = vunpack.c.l.b16 %v104
    %v304 = vunpack.c.l.b16 %v105
    %v305 = vunpack.c.l.b16 %v106
    %v306 = vunpack.c.l.b16 %v107
    %v307 = vunpack.c.l.b16 %v108
    %v308 = vunpack.c.l.b16 %v109
    %v309 = vunpack.c.l.b16 %v110
    %v310 = vunpack.c.l.b16 %v111
    %v311 = vunpack.c.l.b16 %v112
    %v312 = vunpack.c.l.b16 %v113
    %v313 = vunpack.c.l.b16 %v114
    %v314 = vunpack.c.l.b16 %v115
    %v315 = vunpack.c.l.b16 %v116
    %v316 = vunpack.c.l.b16 %v117
    %v317 = vunpack.c.l.b16 %v118
    %v318 = vunpack.c.l.b16 %v119
    %v319 = vunpack.c.l.b16 %v120
    %v320 = vunpack.c.l.b16 %v121
    %v321 = vunpack.c.l.b16 %v122
    %v322 = vunpack.c.l.b16 %v123
    %v323 = vunpack.c.l.b16 %v124
    %v324 = vunpack.c.l.b16 %v125
    %v325 = vunpack.c.l.b16 %v126
    %v326 = vunpack.c.l.b16 %v127
    %v327 = vunpack.c.l.b16 %v128
    %v328 = vunpack.c.l.b16 %v129
    %v329 = vunpack.c.l.b16 %v130
    %v330 = vunpack.c.l.b16 %v131
    %v331 = vunpack.c.l.b16 %v132
    %v332 = vunpack.c.l.b16 %v133
    %v333 = vunpack.c.l.b16 %v134
    %v334 = vunpack.c.l.b16 %v135
    %v335 = vunpack.c.l.b16 %v136
    %v336 = vunpack.c.l.b16 %v137
    %v337 = vunpack.c.l.b16 %v138
    %v338 = vunpack.c.l.b16 %v139
    %v339 = vunpack.c.l.b16 %v140
    %v340 = vunpack.c.l.b16 %v141
    %v341 = vunpack.c.l.b16 %v142
    %v342 = vunpack.c.l.b16 %v143
    %v343 = vunpack.c.l.b16 %v144
    %v344 = vunpack.c.l.b16 %v145
    %v345 = vunpack.c.l.b16 %v146
    %v346 = vunpack.c.l.b16 %v147
    %v347 = vunpack.c.l.b16 %v148
    %v348 = vunpack.c.l.b16 %v149
    %v349 = vunpack.c.l.b16 %v150
    %v350 = vunpack.c.l.b16 %v151
    %v351 = vunpack.c.l.b16 %v152
    %v352 = vunpack.c.l.b16 %v153
    %v353 = vunpack.c.l.b16 %v154
    %v354 = vunpack.c.l.b16 %v155
    %v355 = vunpack.c.l.b16 %v156
    %v356 = vunpack.c.l.b16 %v157
    %v357 = vunpack.c.l.b16 %v158
    %v358 = vunpack.c.l.b16 %v159
    %v359 = vunpack.c.l.b16 %v160
    %v360 = vunpack.c.l.b16 %v161
    %v361 = vunpack.c.l.b16 %v162
    %v362 = vunpack.c.l.b16 %v163
    %v363 = vunpack.c.l.b16 %v164
    %v364 = vpack.c.b16 %v269, %v268
    %v365 = vpack.c.b16 %v271, %v270
    %v366 = vpack.c.b16 %v273, %v272
    %v367 = vpack.c.b16 %v275, %v274
    %v368 = vpack.c.b16 %v277, %v276
    %v369 = vpack.c.b16 %v279, %v278
    %v370 = vpack.c.b16 %v281, %v280
    %v371 = vpack.c.b16 %v283, %v282
    %v372 = vpack.c.b16 %v285, %v284
    %v373 = vpack.c.b16 %v287, %v286
    %v374 = vpack.c.b16 %v289, %v288
    %v375 = vpack.c.b16 %v291, %v290
    %v376 = vpack.c.b16 %v293, %v292
    %v377 = vpack.c.b16 %v295, %v294
    %v378 = vpack.c.b16 %v297, %v296
    %v379 = vpack.c.b16 %v299, %v298
    %v380 = vpack.c.b16 %v301, %v300
    %v381 = vpack.c.b16 %v303, %v302
    %v382 = vpack.c.b16 %v305, %v304
    %v383 = vpack.c.b16 %v307, %v306
    %v384 = vpack.c.b16 %v309, %v308
    %v385 = vpack.c.b16 %v311, %v310
    %v386 = vpack.c.b16 %v313, %v312
    %v387 = vpack.c.b16 %v315, %v314
    %v388 = vpack.c.b16 %v317, %v316
    %v389 = vpack.c.b16 %v319, %v318
    %v390 = vpack.c.b16 %v321, %v320
    %v391 = vpack.c.b16 %v323, %v322
    %v392 = vpack.c.b16 %v325, %v324
    %v393 = vpack.c.b16 %v327, %v326
    %v394 = vpack.c.b16 %v329, %v328
    %v395 = vpack.c.b16 %v331, %v330
    %v396 = vpack.c.b16 %v333, %v332
    %v397 = vpack.c.b16 %v335, %v334
    %v398 = vpack.c.b16 %v337, %v336
    %v399 = vpack.c.b16 %v339, %v338
    %v400 = vpack.c.b16 %v341, %v340
    %v401 = vpack.c.b16 %v343, %v342
    %v402 = vpack.c.b16 %v345, %v344
    %v403 = vpack.c.b16 %v347, %v346
    %v404 = vpack.c.b16 %v349, %v348
    %v405 = vpack.c.b16 %v351, %v350
    %v406 = vpack.c.b16 %v353, %v352
    %v407 = vpack.c.b16 %v355, %v354
    %v408 = vpack.c.b16 %v357, %v356
    %v409 = vpack.c.b16 %v359, %v358
    %v410 = vpack.c.b16 %v361, %v360
    %v411 = vpack.c.b16 %v363, %v362
    %460 = vmatprep.subr.bf16.mxu0 0
    %461 = vmatpush1.bf16.msra.mxu0 %v364
    %462 = vmatprep.subr.bf16.mxu0 0
    %463 = vmatpush1.bf16.msra.mxu0 %v365
    %464 = vmatprep.subr.bf16.mxu0 0
    %465 = vmatpush1.bf16.msra.mxu0 %v366
    %466 = vmatprep.subr.bf16.mxu0 0
    %467 = vmatpush1.bf16.msra.mxu0 %v367
    %468 = vmatprep.subr.bf16.mxu0 0
    %469 = vmatpush1.bf16.msra.mxu0 %v368
    %470 = vmatprep.subr.bf16.mxu0 0
    %471 = vmatpush1.bf16.msra.mxu0 %v369
    %472 = vmatprep.subr.bf16.mxu0 0
    %473 = vmatpush1.bf16.msra.mxu0 %v370
    %474 = vmatprep.subr.bf16.mxu0 0
    %475 = vmatpush1.bf16.msra.mxu0 %v371
    %476 = vmatprep.subr.bf16.mxu0 0
    %477 = vmatpush1.bf16.msra.mxu0 %v372
    %478 = vmatprep.subr.bf16.mxu0 0
    %479 = vmatpush1.bf16.msra.mxu0 %v373
    %480 = vmatprep.subr.bf16.mxu0 0
    %481 = vmatpush1.bf16.msra.mxu0 %v374
    %482 = vmatprep.subr.bf16.mxu0 0
    %483 = vmatpush1.bf16.msra.mxu0 %v375
    %484 = vmatprep.subr.bf16.mxu0 0
    %485 = vmatpush1.bf16.msra.mxu0 %v376
    %486 = vmatprep.subr.bf16.mxu0 0
    %487 = vmatpush1.bf16.msra.mxu0 %v377
    %488 = vmatprep.subr.bf16.mxu0 0
    %489 = vmatpush1.bf16.msra.mxu0 %v378
    %490 = vmatprep.subr.bf16.mxu0 0
    %491 = vmatpush1.bf16.msra.mxu0 %v379
    %492 = vmatprep.mubr.bf16.mxu0 %v64
    %493 = vmatmul.mubr.bf16.gmra.mrb[0].mxu0 %v63
    %v494 = vpop.f32.mrb[0].mxu0
    %v495 = vadd.f32 %v170, %v494
    %v496 = vpop.f32.mrb[0].mxu0
    %v497 = vpop.f32.mrb[0].mxu0
    %v498 = vpop.f32.mrb[0].mxu0
    %499 = vdwg.mxu0
    %500 = vmatprep.subr.bf16.mxu0 0
    %501 = vmatpush1.bf16.msra.mxu0 %v380
    %502 = vmatprep.subr.bf16.mxu0 0
    %503 = vmatpush1.bf16.msra.mxu0 %v381
    %504 = vmatprep.subr.bf16.mxu0 0
    %505 = vmatpush1.bf16.msra.mxu0 %v382
    %506 = vmatprep.subr.bf16.mxu0 0
    %507 = vmatpush1.bf16.msra.mxu0 %v383
    %508 = vmatprep.subr.bf16.mxu0 0
    %509 = vmatpush1.bf16.msra.mxu0 %v384
    %510 = vmatprep.subr.bf16.mxu0 0
    %511 = vmatpush1.bf16.msra.mxu0 %v385
    %512 = vmatprep.subr.bf16.mxu0 0
    %513 = vmatpush1.bf16.msra.mxu0 %v386
    %514 = vmatprep.subr.bf16.mxu0 0
    %515 = vmatpush1.bf16.msra.mxu0 %v387
    %516 = vmatprep.subr.bf16.mxu0 0
    %517 = vmatpush1.bf16.msra.mxu0 %v388
    %518 = vmatprep.subr.bf16.mxu0 0
    %519 = vmatpush1.bf16.msra.mxu0 %v389
    %520 = vmatprep.subr.bf16.mxu0 0
    %521 = vmatpush1.bf16.msra.mxu0 %v390
    %522 = vmatprep.subr.bf16.mxu0 0
    %523 = vmatpush1.bf16.msra.mxu0 %v391
    %524 = vmatprep.subr.bf16.mxu0 0
    %525 = vmatpush1.bf16.msra.mxu0 %v392
    %526 = vmatprep.subr.bf16.mxu0 0
    %527 = vmatpush1.bf16.msra.mxu0 %v393
    %528 = vmatprep.subr.bf16.mxu0 0
    %529 = vmatpush1.bf16.msra.mxu0 %v394
    %530 = vmatprep.subr.bf16.mxu0 0
    %531 = vmatpush1.bf16.msra.mxu0 %v395
    %532 = vmatprep.mubr.bf16.mxu0 %v66
    %533 = vmatmul.mubr.bf16.gmra.mrb[0].mxu0 %v65
    %v534 = vpop.f32.mrb[0].mxu0
    %v535 = vadd.f32 %v495, %v534
    %v536 = vpop.f32.mrb[0].mxu0
    %v537 = vpop.f32.mrb[0].mxu0
    %v538 = vpop.f32.mrb[0].mxu0
    %539 = vdwg.mxu0
    %540 = vmatprep.subr.bf16.mxu0 0
    %541 = vmatpush1.bf16.msra.mxu0 %v396
    %542 = vmatprep.subr.bf16.mxu0 0
    %543 = vmatpush1.bf16.msra.mxu0 %v397
    %544 = vmatprep.subr.bf16.mxu0 0
    %545 = vmatpush1.bf16.msra.mxu0 %v398
    %546 = vmatprep.subr.bf16.mxu0 0
    %547 = vmatpush1.bf16.msra.mxu0 %v399
    %548 = vmatprep.subr.bf16.mxu0 0
    %549 = vmatpush1.bf16.msra.mxu0 %v400
    %550 = vmatprep.subr.bf16.mxu0 0
    %551 = vmatpush1.bf16.msra.mxu0 %v401
    %552 = vmatprep.subr.bf16.mxu0 0
    %553 = vmatpush1.bf16.msra.mxu0 %v402
    %554 = vmatprep.subr.bf16.mxu0 0
    %555 = vmatpush1.bf16.msra.mxu0 %v403
    %556 = vmatprep.subr.bf16.mxu0 0
    %557 = vmatpush1.bf16.msra.mxu0 %v404
    %558 = vmatprep.subr.bf16.mxu0 0
    %559 = vmatpush1.bf16.msra.mxu0 %v405
    %560 = vmatprep.subr.bf16.mxu0 0
    %561 = vmatpush1.bf16.msra.mxu0 %v406
    %562 = vmatprep.subr.bf16.mxu0 0
    %563 = vmatpush1.bf16.msra.mxu0 %v407
    %564 = vmatprep.subr.bf16.mxu0 0
    %565 = vmatpush1.bf16.msra.mxu0 %v408
    %566 = vmatprep.subr.bf16.mxu0 0
    %567 = vmatpush1.bf16.msra.mxu0 %v409
    %568 = vmatprep.subr.bf16.mxu0 0
    %569 = vmatpush1.bf16.msra.mxu0 %v410
    %570 = vmatprep.subr.bf16.mxu0 0
    %571 = vmatpush1.bf16.msra.mxu0 %v411
    %572 = vmatprep.mubr.bf16.mxu0 %v68
    %573 = vmatmul.mubr.bf16.gmra.mrb[0].mxu0 %v67
    %v574 = vpop.f32.mrb[0].mxu0
    %v575 = vadd.f32 %v535, %v574
    %v576 = vpop.f32.mrb[0].mxu0
    %v577 = vpop.f32.mrb[0].mxu0
    %v578 = vpop.f32.mrb[0].mxu0
    %579 = vdwg.mxu0
    %v580 = vmax.f32 %v575, 0.0
    %v581 = vpack.c.bf16 %v580, %v580
    %v582 = vld [vmem:[%s3] sm:$0xf]
    %v583 = vld [vmem:[%s3 + $0x4] sm:$0xf]
    %v584 = vld [vmem:[%s3 + $0x8] sm:$0xf]
    %v585 = vld [vmem:[%s4] sm:$0x1]
    %v587 = vlaneseq
    %v588 = vshrl.u32 %v587, 7
    %v589 = vsub.s32 0, %v588
    %v590 = vrot.slane %v585, %v589
    %v595 = vunpack.c.l.b16 %v582
    %v596 = vunpack.c.l.b16 %v583
    %v597 = vunpack.c.l.b16 %v584
    %v598 = vpack.c.b16 %v596, %v595
    %v599 = vpack.c.b16 %v597, %v597
    %vm601 = vcmask 195584
    %v603 = vsel %vm601, %v581, 0
    %vm605 = vcmask 1043456
    %v607 = vsel %vm605, %v599, 0
    %609 = vmatprep.subr.bf16.mxu0 0
    %610 = vmatpush1.bf16.msra.mxu0 %v598
    %611 = vmatprep.subr.bf16.mxu0 0
    %612 = vmatpush1.bf16.msra.mxu0 %v607
    %613 = vmatprep.subr.bf16.mxu0 0
    %614 = vmatpush1.bf16.msra.mxu0 0
    %615 = vmatprep.subr.bf16.mxu0 0
    %616 = vmatpush1.bf16.msra.mxu0 0
    %617 = vmatprep.subr.bf16.mxu0 0
    %618 = vmatpush1.bf16.msra.mxu0 0
    %619 = vmatprep.subr.bf16.mxu0 0
    %620 = vmatpush1.bf16.msra.mxu0 0
    %621 = vmatprep.subr.bf16.mxu0 0
    %622 = vmatpush1.bf16.msra.mxu0 0
    %623 = vmatprep.subr.bf16.mxu0 0
    %624 = vmatpush1.bf16.msra.mxu0 0
    %625 = vmatprep.subr.bf16.mxu0 0
    %626 = vmatpush1.bf16.msra.mxu0 0
    %627 = vmatprep.subr.bf16.mxu0 0
    %628 = vmatpush1.bf16.msra.mxu0 0
    %629 = vmatprep.subr.bf16.mxu0 0
    %630 = vmatpush1.bf16.msra.mxu0 0
    %631 = vmatprep.subr.bf16.mxu0 0
    %632 = vmatpush1.bf16.msra.mxu0 0
    %633 = vmatprep.subr.bf16.mxu0 0
    %634 = vmatpush1.bf16.msra.mxu0 0
    %635 = vmatprep.subr.bf16.mxu0 0
    %636 = vmatpush1.bf16.msra.mxu0 0
    %637 = vmatprep.subr.bf16.mxu0 0
    %638 = vmatpush1.bf16.msra.mxu0 0
    %639 = vmatprep.subr.bf16.mxu0 0
    %640 = vmatpush1.bf16.msra.mxu0 0
    %641 = vmatprep.mubr.bf16.mxu0 0
    %642 = vmatmul.mubr.bf16.gmra.mrb[0].mxu0 %v603
    %v643 = vpop.f32.mrb[0].mxu0
    %v644 = vadd.f32 %v590, %v643
    %v645 = vpop.f32.mrb[0].mxu0
    %v646 = vpop.f32.mrb[0].mxu0
    %v647 = vpop.f32.mrb[0].mxu0
    %648 = vdwg.mxu0
    %v649 = vmax.f32 %v644, 0.0
    %v650 = vpack.c.bf16 %v649, %v649
    %v651 = vld [vmem:[%s5] sm:$0xf]
    %v652 = vld [vmem:[%s5 + $0x4] sm:$0xf]
    %v653 = vld [vmem:[%s5 + $0x8] sm:$0xf]
    %v654 = vld [vmem:[%s5 + $0xc] sm:$0xf]
    %v655 = vld [vmem:[%s6] sm:$0x1]
    %v657 = vlaneseq
    %v658 = vshrl.u32 %v657, 7
    %v659 = vsub.s32 0, %v658
    %v660 = vrot.slane %v655, %v659
    %v666 = vunpack.c.l.b16 %v651
    %v667 = vunpack.c.l.b16 %v652
    %v668 = vunpack.c.l.b16 %v653
    %v669 = vunpack.c.l.b16 %v654
    %v670 = vpack.c.b16 %v667, %v666
    %v671 = vpack.c.b16 %v669, %v668
    %vm674 = vcmask 261120
    %v676 = vsel %vm674, %v650, 0
    %678 = vmatprep.subr.bf16.mxu0 0
    %679 = vmatpush1.bf16.msra.mxu0 %v670
    %680 = vmatprep.subr.bf16.mxu0 0
    %681 = vmatpush1.bf16.msra.mxu0 %v671
    %682 = vmatprep.subr.bf16.mxu0 0
    %683 = vmatpush1.bf16.msra.mxu0 0
    %684 = vmatprep.subr.bf16.mxu0 0
    %685 = vmatpush1.bf16.msra.mxu0 0
    %686 = vmatprep.subr.bf16.mxu0 0
    %687 = vmatpush1.bf16.msra.mxu0 0
    %688 = vmatprep.subr.bf16.mxu0 0
    %689 = vmatpush1.bf16.msra.mxu0 0
    %690 = vmatprep.subr.bf16.mxu0 0
    %691 = vmatpush1.bf16.msra.mxu0 0
    %692 = vmatprep.subr.bf16.mxu0 0
    %693 = vmatpush1.bf16.msra.mxu0 0
    %694 = vmatprep.subr.bf16.mxu0 0
    %695 = vmatpush1.bf16.msra.mxu0 0
    %696 = vmatprep.subr.bf16.mxu0 0
    %697 = vmatpush1.bf16.msra.mxu0 0
    %698 = vmatprep.subr.bf16.mxu0 0
    %699 = vmatpush1.bf16.msra.mxu0 0
    %700 = vmatprep.subr.bf16.mxu0 0
    %701 = vmatpush1.bf16.msra.mxu0 0
    %702 = vmatprep.subr.bf16.mxu0 0
    %703 = vmatpush1.bf16.msra.mxu0 0
    %704 = vmatprep.subr.bf16.mxu0 0
    %705 = vmatpush1.bf16.msra.mxu0 0
    %706 = vmatprep.subr.bf16.mxu0 0
    %707 = vmatpush1.bf16.msra.mxu0 0
    %708 = vmatprep.subr.bf16.mxu0 0
    %709 = vmatpush1.bf16.msra.mxu0 0
    %710 = vmatprep.mubr.bf16.mxu0 0
    %711 = vmatmul.mubr.bf16.gmra.mrb[0].mxu0 %v676
    %v712 = vpop.f32.mrb[0].mxu0
    %v713 = vadd.f32 %v660, %v712
    %v714 = vpop.f32.mrb[0].mxu0
    %v715 = vpop.f32.mrb[0].mxu0
    %v716 = vpop.f32.mrb[0].mxu0
    %717 = vdwg.mxu0
    %vm718 = vcmask 9216
    %719 = vst.msk [vmem:[#allocation2] sm:$0x3] %vm718, %v713
    // Predicated region
    $region30: #{dqn_forward.1} parent=1 // pred_check
      _
    $region31: #{dqn_forward.1} parent=1 // pred_check_branch
      %721 = sbr.rel (0) target = $region33
    $region32: #{dqn_forward.1} parent=1 // pred_region
      %s723 = ssub.s32 32, 32
      %724 = vsyncadd [#allocation3], %s723
      %s726 = sshll.u32 [#allocation2], 4
      %s727 = int_to_ptr.vmem [resolvable:$true] %s726
      %729 = dma.vmem_to_hbm [thread:$0]  %s727, 32, %s7, [#allocation3]
    $region33: #{dqn_forward.1} parent=1 // pred_fallthru
      _
    // Predicated region
    $region34: #{dqn_forward.1} parent=1 // pred_check
      _
    $region35: #{dqn_forward.1} parent=1 // pred_check_branch
      %731 = sbr.rel (0) target = $region37
    $region36: #{dqn_forward.1} parent=1 // pred_region
      %732 = dma.done [#allocation3], 32
    $region37: #{dqn_forward.1} parent=1 // pred_fallthru
      _
    %733 = vsyncpa [#allocation3], 1

</llo_original>
